<compile_context>
chip_gen: v7x
topology: tpu7x:2x2x1
jax: 0.10.0
libtpu: 0.0.40
codegen_flags: <defaults>
</compile_context>

<pallas_src>
import functools

import jax
import jax.numpy as jnp
from jax.experimental import pallas as pl
from jax.experimental.pallas import tpu as pltpu

INPUT_SIZE = 5
HIDDEN_SIZE = 32
OUTPUT_SIZE = 1
OUT_FEATS = 2 * OUTPUT_SIZE

# Upper bound on the lane-axis batch tile.  VMEM at 4096 lanes: x double-buffer ~2x2 MiB
# (f32, lane-padded) plus ~1.5 MiB of activations - far below every generation's
# scoped-VMEM default (incl. v7x's 64 MiB physical VMEM).
MAX_TILE_B = 4096


def _mlp_kernel(x_ref, w1_ref, w2_ref, w3_ref, b_ref, out_ref, *, bf16_activations):
    # x_ref:  (tile_b, INPUT_SIZE)             natural batch-major layout from HBM
    # wN_ref: (out_features, in_features)      native PyTorch layout, VMEM-resident
    # b_ref:  (2*HIDDEN_SIZE + OUT_FEATS, 1)   the three biases stacked along sublanes
    # out_ref:(OUT_FEATS, tile_b)              single fused lane-dense output slab
    f32 = jnp.float32
    act = jnp.bfloat16 if bf16_activations else jnp.float32  # bf16 tanh only on v6e/v7x

    b_all = b_ref[...]
    b1 = b_all[:HIDDEN_SIZE]
    b2 = b_all[HIDDEN_SIZE:2 * HIDDEN_SIZE]
    b3 = b_all[2 * HIDDEN_SIZE:]

    # Widen first (v5e-safe even for a bf16 x stream), then put batch on the lane axis
    # with a single in-kernel transpose (XLU slot -- free here).
    xT = x_ref[...].astype(f32).T                                      # (INPUT_SIZE, tile_b)

    z1 = jnp.dot(w1_ref[...], xT, preferred_element_type=f32) + b1     # (HIDDEN, tile_b)
    h1 = jnp.tanh(z1.astype(act))
    z2 = jnp.dot(w2_ref[...].astype(act), h1, preferred_element_type=f32) + b2
    h2 = jnp.tanh(z2.astype(act))
    y = jnp.dot(w3_ref[...].astype(act), h2, preferred_element_type=f32) + b3
    out_ref[...] = y.astype(out_ref.dtype)                             # (OUT_FEATS, tile_b)


def _pick_tile_b(b_in, max_tile_b):
    # ~Half the lane-rounded batch so the "parallel" grid has >= 2 steps whenever
    # possible (keeps both v7x TensorCores busy), capped by max_tile_b.
    half = ((pl.cdiv(b_in, 2) + 127) // 128) * 128
    return max(128, min(max_tile_b, half))


@functools.partial(jax.jit, static_argnames=("max_tile_b", "bf16_activations"))
def _forward(x, params, *, max_tile_b=MAX_TILE_B, bf16_activations=False):
    """x: (B, INPUT_SIZE) float32 or bfloat16.  Returns (mean, logvar), each (B, OUTPUT_SIZE)."""
    w1, b1, w2, b2, w3, b3 = params
    b_all = jnp.concatenate([b1, b2, b3]).astype(jnp.float32).reshape(-1, 1)  # (66, 1)

    B = x.shape[0]
    if B < 128:                       # tiny batches: pad up to one lane tile (negligible)
        b_in = 128
        x_in = jnp.pad(x, ((0, b_in - B), (0, 0)))
    else:                             # large batches: NO wrapper pad/transpose; Pallas
        b_in = B                      # masks the ragged last block.
        x_in = x
    tile_b = _pick_tile_b(b_in, max_tile_b)
    n_tiles = pl.cdiv(b_in, tile_b)

    resident = lambda arr: pl.BlockSpec(arr.shape, lambda i: (0, 0))  # VMEM-resident consts

    flops = 2 * b_in * (INPUT_SIZE * HIDDEN_SIZE
                        + HIDDEN_SIZE * HIDDEN_SIZE
                        + HIDDEN_SIZE * OUT_FEATS)
    weight_bytes = 4 * (INPUT_SIZE * HIDDEN_SIZE + HIDDEN_SIZE * HIDDEN_SIZE
                        + HIDDEN_SIZE * OUT_FEATS + 2 * HIDDEN_SIZE + OUT_FEATS)
    cost = pl.CostEstimate(
        flops=flops,
        transcendentals=2 * HIDDEN_SIZE * b_in,
        bytes_accessed=b_in * INPUT_SIZE * x_in.dtype.itemsize
        + 4 * b_in * OUT_FEATS + weight_bytes,
    )

    y = pl.pallas_call(
        functools.partial(_mlp_kernel, bf16_activations=bf16_activations),
        out_shape=jax.ShapeDtypeStruct((OUT_FEATS, b_in), jnp.float32),
        grid=(n_tiles,),
        in_specs=[
            pl.BlockSpec((tile_b, INPUT_SIZE), lambda i: (i, 0)),  # x: natural layout
            resident(w1), resident(w2), resident(w3), resident(b_all),
        ],
        out_specs=pl.BlockSpec((OUT_FEATS, tile_b), lambda i: (0, i)),
        compiler_params=pltpu.CompilerParams(
            dimension_semantics=("parallel",),   # megacore sharding on v7x
        ),
        cost_estimate=cost,
    )(x_in, w1, w2, w3, b_all)

    y = y[:, :B] if b_in != B else y
    # Lane-dense (2*OUTPUT_SIZE, B) slab -> row slices.  For OUTPUT_SIZE == 1 the .T is a
    # free reshape of a contiguous row (the old full (B, 2) wrapper transpose is gone).
    mean = y[:OUTPUT_SIZE, :].T
    logvar = y[OUTPUT_SIZE:, :].T
    return mean, logvar


def generative_sampler_forward(params, x=None, *, max_tile_b=MAX_TILE_B,
                               bf16_activations=False):
    """Mirrors GenerativeSampler.forward: x=None -> ones([1, input_size]) (use_seed=False)."""
    if x is None:
        x = jnp.ones((1, INPUT_SIZE), dtype=jnp.float32)
    return _forward(x, params, max_tile_b=max_tile_b, bf16_activations=bf16_activations)


def init_linear(key, in_features, out_features):
    """Mirror torch init_params: weight ~ N(0,1), rows L2-normalised over in_features;
    bias = 0.  Weight kept in PyTorch (out, in) layout; bias as a flat (out,) vector."""
    w = jax.random.normal(key, (out_features, in_features), dtype=jnp.float32)
    w = w / jnp.sqrt(jnp.sum(w * w, axis=1, keepdims=True))
    b = jnp.zeros((out_features,), dtype=jnp.float32)
    return w, b


def make_params(seed=0):
    k = jax.random.PRNGKey(seed)
    k1, k2, k3 = jax.random.split(k, 3)
    w1, b1 = init_linear(k1, INPUT_SIZE, HIDDEN_SIZE)
    w2, b2 = init_linear(k2, HIDDEN_SIZE, HIDDEN_SIZE)
    w3, b3 = init_linear(k3, HIDDEN_SIZE, OUTPUT_SIZE * 2)
    return (w1, b1, w2, b2, w3, b3)


def _ref_forward(x, params):
    """Plain-JAX reference of the same math (PyTorch layout: y = x @ W.T + b)."""
    w1, b1, w2, b2, w3, b3 = params
    h = jnp.tanh(x @ w1.T + b1)
    h = jnp.tanh(h @ w2.T + b2)
    y = h @ w3.T + b3
    return y[:, :OUTPUT_SIZE], y[:, OUTPUT_SIZE:]


if __name__ == "__main__":
    params = make_params(seed=0)

    # 1) Literal use_seed=False path of the PyTorch forward: x = ones([1, input_size]).
    mean1, logvar1 = generative_sampler_forward(params)
    jax.block_until_ready((mean1, logvar1))
    rm, rl = _ref_forward(jnp.ones((1, INPUT_SIZE), jnp.float32), params)
    assert mean1.shape == (1, OUTPUT_SIZE) and logvar1.shape == (1, OUTPUT_SIZE)
    assert jnp.allclose(mean1, rm, atol=1e-5) and jnp.allclose(logvar1, rl, atol=1e-5)

    # 2) Batched f32 input: 300 samples -> tile_b=256, 2 grid tiles with a ragged,
    #    Pallas-masked last block (exercises the big-tile / no-wrapper-padding path).
    xb = jax.random.uniform(jax.random.PRNGKey(0), (300, INPUT_SIZE), dtype=jnp.float32)
    meanb, logvarb = generative_sampler_forward(params, xb)
    jax.block_until_ready((meanb, logvarb))
    rmb, rlb = _ref_forward(xb, params)
    assert jnp.allclose(meanb, rmb, atol=1e-5) and jnp.allclose(logvarb, rlb, atol=1e-5)

    # 3) bf16 x stream (halves the dominant HBM stream on every generation; the kernel
    #    widens to f32 before any math, so it is v5e-safe).  Compare against the f32
    #    reference evaluated on the same bf16-rounded inputs.
    #    # TODO(synk): flip bf16_activations=True on v6e/v7x for the bf16 EUP/MXU fast path.
    xh = xb.astype(jnp.bfloat16)
    meanh, logvarh = generative_sampler_forward(params, xh)
    jax.block_until_ready((meanh, logvarh))
    rmh, rlh = _ref_forward(xh.astype(jnp.float32), params)
    assert jnp.allclose(meanh, rmh, atol=1e-4) and jnp.allclose(logvarh, rlh, atol=1e-4)

    print("KERNEL_OK")
</pallas_src>

<mosaic_0001>
module attributes {stable_mosaic.version = 11 : i64} {
  func.func @_mlp_kernel(%arg0: i32, %arg1: memref<128x5xf32, #tpu.memory_space<vmem>>, %arg2: memref<32x5xf32, #tpu.memory_space<vmem>>, %arg3: memref<32x32xf32, #tpu.memory_space<vmem>>, %arg4: memref<2x32xf32, #tpu.memory_space<vmem>>, %arg5: memref<66x1xf32, #tpu.memory_space<vmem>>, %arg6: memref<2x128xf32, #tpu.memory_space<vmem>>) attributes {dimension_semantics = [#tpu.dimension_semantics<parallel>], iteration_bounds = array<i64: 1>, scalar_prefetch = 0 : i64, scratch_operands = 0 : i64, tpu.core_type = #tpu.core_type<tc>, window_params = [{transform_indices = @transform_0, window_bounds = array<i64: 128, 5>}, {pipeline_mode = #tpu.pipeline_mode<synchronous>, transform_indices = @transform_1, window_bounds = array<i64: 32, 5>}, {pipeline_mode = #tpu.pipeline_mode<synchronous>, transform_indices = @transform_2, window_bounds = array<i64: 32, 32>}, {pipeline_mode = #tpu.pipeline_mode<synchronous>, transform_indices = @transform_3, window_bounds = array<i64: 2, 32>}, {pipeline_mode = #tpu.pipeline_mode<synchronous>, transform_indices = @transform_4, window_bounds = array<i64: 66, 1>}, {transform_indices = @transform_5, window_bounds = array<i64: 2, 128>}]} {
    %c0 = arith.constant 0 : index
    %c0_0 = arith.constant 0 : index
    %0 = vector.load %arg5[%c0, %c0_0] : memref<66x1xf32, #tpu.memory_space<vmem>>, vector<66x1xf32>
    %1 = vector.extract_strided_slice %0 {offsets = [0, 0], sizes = [32, 1], strides = [1, 1]} : vector<66x1xf32> to vector<32x1xf32>
    %2 = vector.extract_strided_slice %0 {offsets = [32, 0], sizes = [32, 1], strides = [1, 1]} : vector<66x1xf32> to vector<32x1xf32>
    %3 = vector.extract_strided_slice %0 {offsets = [64, 0], sizes = [2, 1], strides = [1, 1]} : vector<66x1xf32> to vector<2x1xf32>
    %c0_1 = arith.constant 0 : index
    %c0_2 = arith.constant 0 : index
    %4 = vector.load %arg1[%c0_1, %c0_2] : memref<128x5xf32, #tpu.memory_space<vmem>>, vector<128x5xf32>
    %5 = tpu.transpose %4, [1, 0] : vector<128x5xf32> -> vector<5x128xf32>
    %c0_3 = arith.constant 0 : index
    %c0_4 = arith.constant 0 : index
    %6 = vector.load %arg2[%c0_3, %c0_4] : memref<32x5xf32, #tpu.memory_space<vmem>>, vector<32x5xf32>
    %cst = arith.constant dense<0.000000e+00> : vector<32x128xf32>
    %7 = tpu.matmul %6, %5, %cst {dimension_numbers = #tpu.dot_dimension_numbers<[1], [0], [0], [1], [0, 0, 1, 1], [], []>} : vector<32x5xf32>, vector<5x128xf32>, vector<32x128xf32> -> vector<32x128xf32>
    %8 = vector.broadcast %1 : vector<32x1xf32> to vector<32x128xf32>
    %9 = arith.addf %7, %8 : vector<32x128xf32>
    %10 = math.tanh %9 : vector<32x128xf32>
    %c0_5 = arith.constant 0 : index
    %c0_6 = arith.constant 0 : index
    %11 = vector.load %arg3[%c0_5, %c0_6] : memref<32x32xf32, #tpu.memory_space<vmem>>, vector<32x32xf32>
    %cst_7 = arith.constant dense<0.000000e+00> : vector<32x128xf32>
    %12 = tpu.matmul %11, %10, %cst_7 {dimension_numbers = #tpu.dot_dimension_numbers<[1], [0], [0], [1], [0, 0, 1, 1], [], []>} : vector<32x32xf32>, vector<32x128xf32>, vector<32x128xf32> -> vector<32x128xf32>
    %13 = vector.broadcast %2 : vector<32x1xf32> to vector<32x128xf32>
    %14 = arith.addf %12, %13 : vector<32x128xf32>
    %15 = math.tanh %14 : vector<32x128xf32>
    %c0_8 = arith.constant 0 : index
    %c0_9 = arith.constant 0 : index
    %16 = vector.load %arg4[%c0_8, %c0_9] : memref<2x32xf32, #tpu.memory_space<vmem>>, vector<2x32xf32>
    %cst_10 = arith.constant dense<0.000000e+00> : vector<2x128xf32>
    %17 = tpu.matmul %16, %15, %cst_10 {dimension_numbers = #tpu.dot_dimension_numbers<[1], [0], [0], [1], [0, 0, 1, 1], [], []>} : vector<2x32xf32>, vector<32x128xf32>, vector<2x128xf32> -> vector<2x128xf32>
    %18 = vector.broadcast %3 : vector<2x1xf32> to vector<2x128xf32>
    %19 = arith.addf %17, %18 : vector<2x128xf32>
    %c0_11 = arith.constant 0 : index
    %c0_12 = arith.constant 0 : index
    %20 = vector.load %arg6[%c0_11, %c0_12] : memref<2x128xf32, #tpu.memory_space<vmem>>, vector<2x128xf32>
    tpu.vector_store %arg6[%c0_11, %c0_12], %19 {strides = array<i32>} : memref<2x128xf32, #tpu.memory_space<vmem>>, vector<2x128xf32>,
    return
  }
  func.func @transform_0(%arg0: i32) -> (i32, i32) {
    %c0_i32 = arith.constant 0 : i32
    %c0_i32_0 = arith.constant 0 : i32
    return %arg0, %c0_i32 : i32, i32
  }
  func.func @transform_1(%arg0: i32) -> (i32, i32) {
    %c0_i32 = arith.constant 0 : i32
    %c0_i32_0 = arith.constant 0 : i32
    %c0_i32_1 = arith.constant 0 : i32
    return %c0_i32, %c0_i32_0 : i32, i32
  }
  func.func @transform_2(%arg0: i32) -> (i32, i32) {
    %c0_i32 = arith.constant 0 : i32
    %c0_i32_0 = arith.constant 0 : i32
    %c0_i32_1 = arith.constant 0 : i32
    return %c0_i32, %c0_i32_0 : i32, i32
  }
  func.func @transform_3(%arg0: i32) -> (i32, i32) {
    %c0_i32 = arith.constant 0 : i32
    %c0_i32_0 = arith.constant 0 : i32
    %c0_i32_1 = arith.constant 0 : i32
    return %c0_i32, %c0_i32_0 : i32, i32
  }
  func.func @transform_4(%arg0: i32) -> (i32, i32) {
    %c0_i32 = arith.constant 0 : i32
    %c0_i32_0 = arith.constant 0 : i32
    %c0_i32_1 = arith.constant 0 : i32
    return %c0_i32, %c0_i32_0 : i32, i32
  }
  func.func @transform_5(%arg0: i32) -> (i32, i32) {
    %c0_i32 = arith.constant 0 : i32
    %c0_i32_0 = arith.constant 0 : i32
    return %c0_i32, %arg0 : i32, i32
  }
}

</mosaic_0001>

<llo_original>
// kernel: _forward.1
$region0: #{_forward.1}
  #allocation0 [shape = 'u32[]', space=smem, size = 0x4, offset = 0x4, fixed_abs, tag = 'smem constant byte address 0x4 - core index']
  #allocation1 [shape = 'u32[144,128]{1,0:T(1,128)}', space=vmem, size = 0x12000, scoped, tag = 'internal scratch']
  %s0 = inlined_call_operand.vmem [shape: f32[128,5], index: 0, kind: input, shape index: {}]
  %s1 = inlined_call_operand.vmem [shape: f32[32,5], index: 1, kind: input, shape index: {}]
  %s2 = inlined_call_operand.vmem [shape: f32[32,32], index: 2, kind: input, shape index: {}]
  %s3 = inlined_call_operand.vmem [shape: f32[2,32], index: 3, kind: input, shape index: {}]
  %s4 = inlined_call_operand.vmem [shape: f32[66,1], index: 4, kind: input, shape index: {}]
  %s5 = inlined_call_operand.vmem [shape: f32[2,128], index: 5, kind: output, shape index: {}]
  %s6 = sld [smem:[#allocation0]]
  $region30: #{_forward.1} parent=0
    _
  %s8 = ssub.s32 1, %s6
  %s9 = scalar_select 0, %s8, %s6
  // Predicated region
  $region2: #{_forward.1} parent=0 // pred_check
    _
  $region3: #{_forward.1} parent=0 // pred_check_branch
    %11 = sbr.rel (0) target = $region5
  $region4: #{_forward.1} parent=0 // pred_region
    _
  $region5: #{_forward.1} parent=0 // pred_fallthru
    _
  // Predicated region
  $region6: #{_forward.1} parent=0 // pred_check
    _
  $region7: #{_forward.1} parent=0 // pred_check_branch
    %13 = sbr.rel (0) target = $region9
  $region8: #{_forward.1} parent=0 // pred_region
    _
  $region9: #{_forward.1} parent=0 // pred_fallthru
    _
  // Predicated region
  $region10: #{_forward.1} parent=0 // pred_check
    _
  $region11: #{_forward.1} parent=0 // pred_check_branch
    %15 = sbr.rel (0) target = $region13
  $region12: #{_forward.1} parent=0 // pred_region
    _
  $region13: #{_forward.1} parent=0 // pred_fallthru
    _
  // Predicated region
  $region14: #{_forward.1} parent=0 // pred_check
    _
  $region15: #{_forward.1} parent=0 // pred_check_branch
    %17 = sbr.rel (0) target = $region17
  $region16: #{_forward.1} parent=0 // pred_region
    _
  $region17: #{_forward.1} parent=0 // pred_fallthru
    _
  // Predicated region
  $region18: #{_forward.1} parent=0 // pred_check
    _
  $region19: #{_forward.1} parent=0 // pred_check_branch
    %19 = sbr.rel (0) target = $region21
  $region20: #{_forward.1} parent=0 // pred_region
    _
  $region21: #{_forward.1} parent=0 // pred_fallthru
    _
  %v20 = vld [vmem:[%s4] sm:$0xff]
  %v21 = vld [vmem:[%s4 + $0x8] sm:$0xff]
  %v22 = vld [vmem:[%s4 + $0x10] sm:$0xff]
  %v23 = vld [vmem:[%s4 + $0x18] sm:$0xff]
  %v24 = vld [vmem:[%s4 + $0x20] sm:$0xff]
  %v25 = vld [vmem:[%s4 + $0x28] sm:$0xff]
  %v26 = vld [vmem:[%s4 + $0x30] sm:$0xff]
  %v27 = vld [vmem:[%s4 + $0x38] sm:$0xff]
  %v28 = vld [vmem:[%s4 + $0x40] sm:$0x3]
  %v29 = vld [vmem:[%s0] sm:$0xff]
  %v30 = vld [vmem:[%s0 + $0x8] sm:$0xff]
  %v31 = vld [vmem:[%s0 + $0x10] sm:$0xff]
  %v32 = vld [vmem:[%s0 + $0x18] sm:$0xff]
  %v33 = vld [vmem:[%s0 + $0x20] sm:$0xff]
  %v34 = vld [vmem:[%s0 + $0x28] sm:$0xff]
  %v35 = vld [vmem:[%s0 + $0x30] sm:$0xff]
  %v36 = vld [vmem:[%s0 + $0x38] sm:$0xff]
  %v37 = vld [vmem:[%s0 + $0x40] sm:$0xff]
  %v38 = vld [vmem:[%s0 + $0x48] sm:$0xff]
  %v39 = vld [vmem:[%s0 + $0x50] sm:$0xff]
  %v40 = vld [vmem:[%s0 + $0x58] sm:$0xff]
  %v41 = vld [vmem:[%s0 + $0x60] sm:$0xff]
  %v42 = vld [vmem:[%s0 + $0x68] sm:$0xff]
  %v43 = vld [vmem:[%s0 + $0x70] sm:$0xff]
  %v44 = vld [vmem:[%s0 + $0x78] sm:$0xff]
  %v45 = vld [vmem:[%s1] sm:$0xff]
  %v46 = vld [vmem:[%s1 + $0x8] sm:$0xff]
  %v47 = vld [vmem:[%s1 + $0x10] sm:$0xff]
  %v48 = vld [vmem:[%s1 + $0x18] sm:$0xff]
  %50 = vset.pattern.permute.xlu0 0
  %51 = vperm.xlu0 %50, %v20
  %v52 = vpop.permute.xlu0 %51
  %55 = vset.pattern.permute.xlu0 0
  %56 = vperm.xlu0 %55, %v21
  %v57 = vpop.permute.xlu0 %56
  %60 = vset.pattern.permute.xlu0 0
  %61 = vperm.xlu0 %60, %v22
  %v62 = vpop.permute.xlu0 %61
  %65 = vset.pattern.permute.xlu0 0
  %66 = vperm.xlu0 %65, %v23
  %v67 = vpop.permute.xlu0 %66
  %vm69 = vcmask 39936
  %v71 = vsel %vm69, %v45, 0
  %v74 = vsel %vm69, %v46, 0
  %v77 = vsel %vm69, %v47, 0
  %v80 = vsel %vm69, %v48, 0
  %v83 = vsel %vm69, %v29, 0
  %v86 = vsel %vm69, %v30, 0
  %v89 = vsel %vm69, %v31, 0
  %v92 = vsel %vm69, %v32, 0
  %v95 = vsel %vm69, %v33, 0
  %v98 = vsel %vm69, %v34, 0
  %v101 = vsel %vm69, %v35, 0
  %v104 = vsel %vm69, %v36, 0
  %v107 = vsel %vm69, %v37, 0
  %v110 = vsel %vm69, %v38, 0
  %v113 = vsel %vm69, %v39, 0
  %v116 = vsel %vm69, %v40, 0
  %v119 = vsel %vm69, %v41, 0
  %v122 = vsel %vm69, %v42, 0
  %v125 = vsel %vm69, %v43, 0
  %v128 = vsel %vm69, %v44, 0
  %130 = vmatprep.subr.mxu0 0.0
  %131 = vmatpush1.xpose.msra.mxu0 %v83
  %132 = vmatprep.subr.mxu0 0.0
  %133 = vmatpush1.xpose.msra.mxu0 %v86
  %134 = vmatprep.subr.mxu0 0.0
  %135 = vmatpush1.xpose.msra.mxu0 %v89
  %136 = vmatprep.subr.mxu0 0.0
  %137 = vmatpush1.xpose.msra.mxu0 %v92
  %138 = vmatprep.subr.mxu0 0.0
  %139 = vmatpush1.xpose.msra.mxu0 %v95
  %140 = vmatprep.subr.mxu0 0.0
  %141 = vmatpush1.xpose.msra.mxu0 %v98
  %142 = vmatprep.subr.mxu0 0.0
  %143 = vmatpush1.xpose.msra.mxu0 %v101
  %144 = vmatprep.subr.mxu0 0.0
  %145 = vmatpush1.xpose.msra.mxu0 %v104
  %146 = vmatprep.subr.mxu0 0.0
  %147 = vmatpush1.xpose.msra.mxu0 %v107
  %148 = vmatprep.subr.mxu0 0.0
  %149 = vmatpush1.xpose.msra.mxu0 %v110
  %150 = vmatprep.subr.mxu0 0.0
  %151 = vmatpush1.xpose.msra.mxu0 %v113
  %152 = vmatprep.subr.mxu0 0.0
  %153 = vmatpush1.xpose.msra.mxu0 %v116
  %154 = vmatprep.subr.mxu0 0.0
  %155 = vmatpush1.xpose.msra.mxu0 %v119
  %156 = vmatprep.subr.mxu0 0.0
  %157 = vmatpush1.xpose.msra.mxu0 %v122
  %158 = vmatprep.subr.mxu0 0.0
  %159 = vmatpush1.xpose.msra.mxu0 %v125
  %160 = vmatprep.subr.mxu0 0.0
  %161 = vmatpush1.xpose.msra.mxu0 %v128
  %162 = vmatprep.subr.mxu0 0.0
  %163 = vmatpush1.xpose.msra.mxu0 0.0
  %164 = vmatprep.subr.mxu0 0.0
  %165 = vmatpush1.xpose.msra.mxu0 0.0
  %166 = vmatprep.subr.mxu0 0.0
  %167 = vmatpush1.xpose.msra.mxu0 0.0
  %168 = vmatprep.subr.mxu0 0.0
  %169 = vmatpush1.xpose.msra.mxu0 0.0
  %170 = vmatprep.subr.mxu0 0.0
  %171 = vmatpush1.xpose.msra.mxu0 0.0
  %172 = vmatprep.subr.mxu0 0.0
  %173 = vmatpush1.xpose.msra.mxu0 0.0
  %174 = vmatprep.subr.mxu0 0.0
  %175 = vmatpush1.xpose.msra.mxu0 0.0
  %176 = vmatprep.subr.mxu0 0.0
  %177 = vmatpush1.xpose.msra.mxu0 0.0
  %178 = vmatprep.subr.mxu0 0.0
  %179 = vmatpush1.xpose.msra.mxu0 0.0
  %180 = vmatprep.subr.mxu0 0.0
  %181 = vmatpush1.xpose.msra.mxu0 0.0
  %182 = vmatprep.subr.mxu0 0.0
  %183 = vmatpush1.xpose.msra.mxu0 0.0
  %184 = vmatprep.subr.mxu0 0.0
  %185 = vmatpush1.xpose.msra.mxu0 0.0
  %186 = vmatprep.subr.mxu0 0.0
  %187 = vmatpush1.xpose.msra.mxu0 0.0
  %188 = vmatprep.subr.mxu0 0.0
  %189 = vmatpush1.xpose.msra.mxu0 0.0
  %190 = vmatprep.subr.mxu0 0.0
  %191 = vmatpush1.xpose.msra.mxu0 0.0
  %192 = vmatprep.subr.mxu0 0.0
  %193 = vmatpush1.xpose.msra.mxu0 0.0
  %194 = vmatprep.mubr.f32.mxu0 0.0
  %195 = vmatmul.mubr.f32.gmra.mrb[0].mxu0 %v71
  %v196 = vpop.f32.mrb[0].mxu0
  %v197 = vadd.f32 %v52, %v196
  %v198 = vpop.f32.mrb[0].mxu0
  %199 = vmatprep.mubr.f32.mxu0 0.0
  %200 = vmatmul.mubr.f32.gmra.mrb[0].mxu0 %v74
  %v201 = vpop.f32.mrb[0].mxu0
  %v202 = vadd.f32 %v57, %v201
  %v203 = vpop.f32.mrb[0].mxu0
  %204 = vmatprep.mubr.f32.mxu0 0.0
  %205 = vmatmul.mubr.f32.gmra.mrb[0].mxu0 %v77
  %v206 = vpop.f32.mrb[0].mxu0
  %v207 = vadd.f32 %v62, %v206
  %v208 = vpop.f32.mrb[0].mxu0
  %209 = vmatprep.mubr.f32.mxu0 0.0
  %210 = vmatmul.mubr.f32.gmra.mrb[0].mxu0 %v80
  %v211 = vpop.f32.mrb[0].mxu0
  %v212 = vadd.f32 %v67, %v211
  %v213 = vpop.f32.mrb[0].mxu0
  %214 = vdwg.mxu0
  %v215 = vtanh.pop %v197
  %v216 = vtanh.pop %v202
  %v217 = vtanh.pop %v207
  %v218 = vtanh.pop %v212
  %v219 = vld [vmem:[%s2] sm:$0xff]
  %v220 = vld [vmem:[%s2 + $0x8] sm:$0xff]
  %v221 = vld [vmem:[%s2 + $0x10] sm:$0xff]
  %v222 = vld [vmem:[%s2 + $0x18] sm:$0xff]
  %224 = vset.pattern.permute.xlu0 0
  %225 = vperm.xlu0 %224, %v24
  %v226 = vpop.permute.xlu0 %225
  %229 = vset.pattern.permute.xlu0 0
  %230 = vperm.xlu0 %229, %v25
  %v231 = vpop.permute.xlu0 %230
  %234 = vset.pattern.permute.xlu0 0
  %235 = vperm.xlu0 %234, %v26
  %v236 = vpop.permute.xlu0 %235
  %239 = vset.pattern.permute.xlu0 0
  %240 = vperm.xlu0 %239, %v27
  %v241 = vpop.permute.xlu0 %240
  %vm243 = vcmask 261120
  %v245 = vsel %vm243, %v219, 0
  %v248 = vsel %vm243, %v220, 0
  %v251 = vsel %vm243, %v221, 0
  %v254 = vsel %vm243, %v222, 0
  %256 = vmatprep.subr.mxu0 0.0
  %257 = vmatpush1.msra.mxu0 %v215
  %258 = vmatprep.subr.mxu0 0.0
  %259 = vmatpush1.msra.mxu0 %v216
  %260 = vmatprep.subr.mxu0 0.0
  %261 = vmatpush1.msra.mxu0 %v217
  %262 = vmatprep.subr.mxu0 0.0
  %263 = vmatpush1.msra.mxu0 %v218
  %264 = vmatprep.subr.mxu0 0.0
  %265 = vmatpush1.msra.mxu0 0.0
  %266 = vmatprep.subr.mxu0 0.0
  %267 = vmatpush1.msra.mxu0 0.0
  %268 = vmatprep.subr.mxu0 0.0
  %269 = vmatpush1.msra.mxu0 0.0
  %270 = vmatprep.subr.mxu0 0.0
  %271 = vmatpush1.msra.mxu0 0.0
  %272 = vmatprep.subr.mxu0 0.0
  %273 = vmatpush1.msra.mxu0 0.0
  %274 = vmatprep.subr.mxu0 0.0
  %275 = vmatpush1.msra.mxu0 0.0
  %276 = vmatprep.subr.mxu0 0.0
  %277 = vmatpush1.msra.mxu0 0.0
  %278 = vmatprep.subr.mxu0 0.0
  %279 = vmatpush1.msra.mxu0 0.0
  %280 = vmatprep.subr.mxu0 0.0
  %281 = vmatpush1.msra.mxu0 0.0
  %282 = vmatprep.subr.mxu0 0.0
  %283 = vmatpush1.msra.mxu0 0.0
  %284 = vmatprep.subr.mxu0 0.0
  %285 = vmatpush1.msra.mxu0 0.0
  %286 = vmatprep.subr.mxu0 0.0
  %287 = vmatpush1.msra.mxu0 0.0
  %288 = vmatprep.subr.mxu0 0.0
  %289 = vmatpush1.msra.mxu0 0.0
  %290 = vmatprep.subr.mxu0 0.0
  %291 = vmatpush1.msra.mxu0 0.0
  %292 = vmatprep.subr.mxu0 0.0
  %293 = vmatpush1.msra.mxu0 0.0
  %294 = vmatprep.subr.mxu0 0.0
  %295 = vmatpush1.msra.mxu0 0.0
  %296 = vmatprep.subr.mxu0 0.0
  %297 = vmatpush1.msra.mxu0 0.0
  %298 = vmatprep.subr.mxu0 0.0
  %299 = vmatpush1.msra.mxu0 0.0
  %300 = vmatprep.subr.mxu0 0.0
  %301 = vmatpush1.msra.mxu0 0.0
  %302 = vmatprep.subr.mxu0 0.0
  %303 = vmatpush1.msra.mxu0 0.0
  %304 = vmatprep.subr.mxu0 0.0
  %305 = vmatpush1.msra.mxu0 0.0
  %306 = vmatprep.subr.mxu0 0.0
  %307 = vmatpush1.msra.mxu0 0.0
  %308 = vmatprep.subr.mxu0 0.0
  %309 = vmatpush1.msra.mxu0 0.0
  %310 = vmatprep.subr.mxu0 0.0
  %311 = vmatpush1.msra.mxu0 0.0
  %312 = vmatprep.subr.mxu0 0.0
  %313 = vmatpush1.msra.mxu0 0.0
  %314 = vmatprep.subr.mxu0 0.0
  %315 = vmatpush1.msra.mxu0 0.0
  %316 = vmatprep.subr.mxu0 0.0
  %317 = vmatpush1.msra.mxu0 0.0
  %318 = vmatprep.subr.mxu0 0.0
  %319 = vmatpush1.msra.mxu0 0.0
  %320 = vmatprep.mubr.f32.mxu0 0.0
  %321 = vmatmul.mubr.f32.gmra.mrb[0].mxu0 %v245
  %v322 = vpop.f32.mrb[0].mxu0
  %v323 = vadd.f32 %v226, %v322
  %v324 = vpop.f32.mrb[0].mxu0
  %325 = vmatprep.mubr.f32.mxu0 0.0
  %326 = vmatmul.mubr.f32.gmra.mrb[0].mxu0 %v248
  %v327 = vpop.f32.mrb[0].mxu0
  %v328 = vadd.f32 %v231, %v327
  %v329 = vpop.f32.mrb[0].mxu0
  %330 = vmatprep.mubr.f32.mxu0 0.0
  %331 = vmatmul.mubr.f32.gmra.mrb[0].mxu0 %v251
  %v332 = vpop.f32.mrb[0].mxu0
  %v333 = vadd.f32 %v236, %v332
  %v334 = vpop.f32.mrb[0].mxu0
  %335 = vmatprep.mubr.f32.mxu0 0.0
  %336 = vmatmul.mubr.f32.gmra.mrb[0].mxu0 %v254
  %v337 = vpop.f32.mrb[0].mxu0
  %v338 = vadd.f32 %v241, %v337
  %v339 = vpop.f32.mrb[0].mxu0
  %340 = vdwg.mxu0
  %v341 = vtanh.pop %v323
  %v342 = vtanh.pop %v328
  %v343 = vtanh.pop %v333
  %v344 = vtanh.pop %v338
  %v345 = vld [vmem:[%s3] sm:$0x3]
  %347 = vset.pattern.permute.xlu0 0
  %348 = vperm.xlu0 %347, %v28
  %v349 = vpop.permute.xlu0 %348
  %v352 = vsel %vm243, %v345, 0
  %354 = vmatprep.subr.mxu0 0.0
  %355 = vmatpush1.msra.mxu0 %v341
  %356 = vmatprep.subr.mxu0 0.0
  %357 = vmatpush1.msra.mxu0 %v342
  %358 = vmatprep.subr.mxu0 0.0
  %359 = vmatpush1.msra.mxu0 %v343
  %360 = vmatprep.subr.mxu0 0.0
  %361 = vmatpush1.msra.mxu0 %v344
  %362 = vmatprep.subr.mxu0 0.0
  %363 = vmatpush1.msra.mxu0 0.0
  %364 = vmatprep.subr.mxu0 0.0
  %365 = vmatpush1.msra.mxu0 0.0
  %366 = vmatprep.subr.mxu0 0.0
  %367 = vmatpush1.msra.mxu0 0.0
  %368 = vmatprep.subr.mxu0 0.0
  %369 = vmatpush1.msra.mxu0 0.0
  %370 = vmatprep.subr.mxu0 0.0
  %371 = vmatpush1.msra.mxu0 0.0
  %372 = vmatprep.subr.mxu0 0.0
  %373 = vmatpush1.msra.mxu0 0.0
  %374 = vmatprep.subr.mxu0 0.0
  %375 = vmatpush1.msra.mxu0 0.0
  %376 = vmatprep.subr.mxu0 0.0
  %377 = vmatpush1.msra.mxu0 0.0
  %378 = vmatprep.subr.mxu0 0.0
  %379 = vmatpush1.msra.mxu0 0.0
  %380 = vmatprep.subr.mxu0 0.0
  %381 = vmatpush1.msra.mxu0 0.0
  %382 = vmatprep.subr.mxu0 0.0
  %383 = vmatpush1.msra.mxu0 0.0
  %384 = vmatprep.subr.mxu0 0.0
  %385 = vmatpush1.msra.mxu0 0.0
  %386 = vmatprep.subr.mxu0 0.0
  %387 = vmatpush1.msra.mxu0 0.0
  %388 = vmatprep.subr.mxu0 0.0
  %389 = vmatpush1.msra.mxu0 0.0
  %390 = vmatprep.subr.mxu0 0.0
  %391 = vmatpush1.msra.mxu0 0.0
  %392 = vmatprep.subr.mxu0 0.0
  %393 = vmatpush1.msra.mxu0 0.0
  %394 = vmatprep.subr.mxu0 0.0
  %395 = vmatpush1.msra.mxu0 0.0
  %396 = vmatprep.subr.mxu0 0.0
  %397 = vmatpush1.msra.mxu0 0.0
  %398 = vmatprep.subr.mxu0 0.0
  %399 = vmatpush1.msra.mxu0 0.0
  %400 = vmatprep.subr.mxu0 0.0
  %401 = vmatpush1.msra.mxu0 0.0
  %402 = vmatprep.subr.mxu0 0.0
  %403 = vmatpush1.msra.mxu0 0.0
  %404 = vmatprep.subr.mxu0 0.0
  %405 = vmatpush1.msra.mxu0 0.0
  %406 = vmatprep.subr.mxu0 0.0
  %407 = vmatpush1.msra.mxu0 0.0
  %408 = vmatprep.subr.mxu0 0.0
  %409 = vmatpush1.msra.mxu0 0.0
  %410 = vmatprep.subr.mxu0 0.0
  %411 = vmatpush1.msra.mxu0 0.0
  %412 = vmatprep.subr.mxu0 0.0
  %413 = vmatpush1.msra.mxu0 0.0
  %414 = vmatprep.subr.mxu0 0.0
  %415 = vmatpush1.msra.mxu0 0.0
  %416 = vmatprep.subr.mxu0 0.0
  %417 = vmatpush1.msra.mxu0 0.0
  %418 = vmatprep.mubr.f32.mxu0 0.0
  %419 = vmatmul.mubr.f32.gmra.mrb[0].mxu0 %v352
  %v420 = vpop.f32.mrb[0].mxu0
  %v421 = vadd.f32 %v349, %v420
  %v422 = vpop.f32.mrb[0].mxu0
  %423 = vdwg.mxu0
  %424 = vst [vmem:[%s5] sm:$0x3] %v421
  // Predicated region
  $region22: #{_forward.1} parent=0 // pred_check
    _
  $region23: #{_forward.1} parent=0 // pred_check_branch
    %426 = sbr.rel (0) target = $region25
  $region24: #{_forward.1} parent=0 // pred_region
    _
  $region25: #{_forward.1} parent=0 // pred_fallthru
    _
  // Predicated region
  $region26: #{_forward.1} parent=0 // pred_check
    _
  $region27: #{_forward.1} parent=0 // pred_check_branch
    %428 = sbr.rel (0) target = $region29
  $region28: #{_forward.1} parent=0 // pred_region
    _
  $region29: #{_forward.1} parent=0 // pred_fallthru
    _

</llo_original>
